<compile_context>
chip_gen: v7x
topology: tpu7x:2x2x1
jax: 0.10.0
libtpu: 0.0.40
codegen_flags: <defaults>
</compile_context>

<pallas_src>
import functools

import jax
import jax.numpy as jnp
from jax import lax
from jax.experimental import pallas as pl
from jax.experimental.pallas import tpu as pltpu

EPS = 1e-5  # nn.LayerNorm default eps


def _my_layernorm_kernel(gb_ref, x_ref, o_ref, *, c_true, c_pad):
    # Block shapes: gb_ref (2, Cp) [gamma; beta], x_ref / o_ref (Bt, L, Cp).
    x = x_ref[...].astype(jnp.float32)            # (Bt, L, Cp)
    gb = gb_ref[...].astype(jnp.float32)          # (2, Cp)
    gamma = gb[0:1, :][None]                      # (1, 1, Cp)
    beta = gb[1:2, :][None]                       # (1, 1, Cp)

    inv_c = jnp.float32(1.0 / c_true)

    # LayerNorm over the channel (last) dim.  Padded lanes of x are zero, so
    # sum / c_true is the exact mean; the variance masks out padded lanes.
    mean = jnp.sum(x, axis=-1, keepdims=True) * inv_c       # (Bt, L, 1)
    xc = x - mean
    if c_pad != c_true:
        lane = lax.broadcasted_iota(jnp.int32, x.shape, 2)
        xm = jnp.where(lane < c_true, xc, 0.0)
    else:
        xm = xc
    var = jnp.sum(xm * xm, axis=-1, keepdims=True) * inv_c  # (Bt, L, 1)
    x_hat = xc * lax.rsqrt(var + EPS) * gamma + beta         # (Bt, L, Cp)

    # Subtract per-channel mean over the sequence dim (dim=1 in PyTorch),
    # broadcast back over L (== .unsqueeze(1).repeat(...) in the module).
    seq_bias = jnp.mean(x_hat, axis=1, keepdims=True)        # (Bt, 1, Cp)
    o_ref[...] = (x_hat - seq_bias).astype(o_ref.dtype)


def my_layernorm(x, gamma, beta):
    """x: (B, L, C); gamma, beta: (C,). Returns (B, L, C)."""
    B, L, C = x.shape

    # Lane-dense channel dim: pad C up to a multiple of 128.  This is a no-op
    # for the common case (d_model a multiple of 128).
    Cp = max(128, ((C + 127) // 128) * 128)
    if Cp != C:
        x_in = jnp.pad(x, ((0, 0), (0, 0), (0, Cp - C)))
        gamma_p = jnp.pad(gamma, (0, Cp - C))
        beta_p = jnp.pad(beta, (0, Cp - C))
    else:
        x_in, gamma_p, beta_p = x, gamma, beta
    gb = jnp.stack([gamma_p, beta_p], axis=0)                # (2, Cp)

    # Pick the batch tile Bt:
    #  - keep the f32 block (Bt*L*Cp*4B) around <= 2 MiB so double-buffered
    #    I/O + temporaries stay under the tightest scoped-VMEM default (v5e),
    #  - keep >= 2 grid steps when B >= 2 (v7x has 2 TensorCores),
    #  - Bt divides B so every block is full.
    bytes_per_batch = L * Cp * 4
    bt_cap = min(B,
                 max(1, (2 * 1024 * 1024) // bytes_per_batch),
                 max(1, -(-B // 2)))
    bt = 1
    for d in range(1, bt_cap + 1):
        if B % d == 0:
            bt = d
    grid = (B // bt,)

    kernel = functools.partial(_my_layernorm_kernel, c_true=C, c_pad=Cp)
    out = pl.pallas_call(
        kernel,
        out_shape=jax.ShapeDtypeStruct((B, L, Cp), x.dtype),
        grid_spec=pltpu.PrefetchScalarGridSpec(
            num_scalar_prefetch=0,
            grid=grid,
            in_specs=[
                pl.BlockSpec((2, Cp), lambda b: (0, 0)),          # gamma/beta
                pl.BlockSpec((bt, L, Cp), lambda b: (b, 0, 0)),   # x
            ],
            out_specs=pl.BlockSpec((bt, L, Cp), lambda b: (b, 0, 0)),
        ),
        compiler_params=pltpu.CompilerParams(
            dimension_semantics=("parallel",),
            vmem_limit_bytes=32 * 1024 * 1024,
        ),
    )(gb, x_in)

    if Cp != C:
        out = out[..., :C]
    return out


def my_layernorm_ref(x, gamma, beta):
    xf = x.astype(jnp.float32)
    mean = jnp.mean(xf, axis=-1, keepdims=True)
    var = jnp.mean((xf - mean) ** 2, axis=-1, keepdims=True)
    x_hat = (xf - mean) * lax.rsqrt(var + EPS) * gamma + beta
    bias = jnp.mean(x_hat, axis=1, keepdims=True)
    return (x_hat - bias).astype(x.dtype)


if __name__ == "__main__":
    key = jax.random.PRNGKey(0)
    B, L, C = 2, 8, 32
    kx, kg, kb = jax.random.split(key, 3)

    x = jax.random.normal(kx, (B, L, C), dtype=jnp.float32)
    # nn.LayerNorm defaults are ones/zeros; perturb so gamma/beta are exercised.
    gamma = 1.0 + 0.1 * jax.random.normal(kg, (C,), dtype=jnp.float32)
    beta = 0.1 * jax.random.normal(kb, (C,), dtype=jnp.float32)

    out = my_layernorm(x, gamma, beta)
    jax.block_until_ready(out)

    ref = my_layernorm_ref(x, gamma, beta)
    assert out.shape == ref.shape, "shape mismatch vs reference"
    assert jnp.allclose(out, ref, atol=1e-5, rtol=1e-5), "mismatch vs reference"

    print("KERNEL_OK")
</pallas_src>

<mosaic_0001>
module attributes {stable_mosaic.version = 11 : i64} {
  func.func @_my_layernorm_kernel(%arg0: i32, %arg1: memref<2x128xf32, #tpu.memory_space<vmem>>, %arg2: memref<1x8x128xf32, #tpu.memory_space<vmem>>, %arg3: memref<1x8x128xf32, #tpu.memory_space<vmem>>) attributes {dimension_semantics = [#tpu.dimension_semantics<parallel>], iteration_bounds = array<i64: 2>, scalar_prefetch = 0 : i64, scratch_operands = 0 : i64, tpu.core_type = #tpu.core_type<tc>, window_params = [{pipeline_mode = #tpu.pipeline_mode<synchronous>, transform_indices = @transform_0, window_bounds = array<i64: 2, 128>}, {transform_indices = @transform_1, window_bounds = array<i64: 1, 8, 128>}, {transform_indices = @transform_2, window_bounds = array<i64: 1, 8, 128>}]} {
    %c0 = arith.constant 0 : index
    %c0_0 = arith.constant 0 : index
    %c0_1 = arith.constant 0 : index
    %0 = vector.load %arg2[%c0, %c0_0, %c0_1] : memref<1x8x128xf32, #tpu.memory_space<vmem>>, vector<1x8x128xf32>
    %c0_2 = arith.constant 0 : index
    %c0_3 = arith.constant 0 : index
    %1 = vector.load %arg1[%c0_2, %c0_3] : memref<2x128xf32, #tpu.memory_space<vmem>>, vector<2x128xf32>
    %2 = vector.extract_strided_slice %1 {offsets = [0, 0], sizes = [1, 128], strides = [1, 1]} : vector<2x128xf32> to vector<1x128xf32>
    %3 = vector.shape_cast %2 : vector<1x128xf32> to vector<1x1x128xf32>
    %4 = vector.extract_strided_slice %1 {offsets = [1, 0], sizes = [1, 128], strides = [1, 1]} : vector<2x128xf32> to vector<1x128xf32>
    %5 = vector.shape_cast %4 : vector<1x128xf32> to vector<1x1x128xf32>
    %cst = arith.constant dense<0.000000e+00> : vector<1x8xf32>
    %6 = vector.multi_reduction <add>, %0, %cst [2] : vector<1x8x128xf32> to vector<1x8xf32>
    %7 = vector.shape_cast %6 : vector<1x8xf32> to vector<1x8x1xf32>
    %cst_4 = arith.constant 3.125000e-02 : f32
    %8 = vector.broadcast %cst_4 : f32 to vector<1x8x1xf32>
    %9 = arith.mulf %7, %8 : vector<1x8x1xf32>
    %10 = vector.broadcast %9 : vector<1x8x1xf32> to vector<1x8x128xf32>
    %11 = arith.subf %0, %10 : vector<1x8x128xf32>
    %12 = tpu.iota {dimensions = array<i32: 2>} : vector<1x8x128xi32>
    %c32_i32 = arith.constant 32 : i32
    %13 = vector.broadcast %c32_i32 : i32 to vector<1x8x128xi32>
    %14 = arith.cmpi slt, %12, %13 : vector<1x8x128xi32>
    %cst_5 = arith.constant 0.000000e+00 : f32
    %15 = vector.broadcast %cst_5 : f32 to vector<1x8x128xf32>
    %16 = arith.select %14, %11, %15 : vector<1x8x128xi1>, vector<1x8x128xf32>
    %17 = arith.mulf %16, %16 : vector<1x8x128xf32>
    %cst_6 = arith.constant dense<0.000000e+00> : vector<1x8xf32>
    %18 = vector.multi_reduction <add>, %17, %cst_6 [2] : vector<1x8x128xf32> to vector<1x8xf32>
    %19 = vector.shape_cast %18 : vector<1x8xf32> to vector<1x8x1xf32>
    %cst_7 = arith.constant 3.125000e-02 : f32
    %20 = vector.broadcast %cst_7 : f32 to vector<1x8x1xf32>
    %21 = arith.mulf %19, %20 : vector<1x8x1xf32>
    %cst_8 = arith.constant 9.99999974E-6 : f32
    %22 = vector.broadcast %cst_8 : f32 to vector<1x8x1xf32>
    %23 = arith.addf %21, %22 : vector<1x8x1xf32>
    %24 = math.rsqrt %23 : vector<1x8x1xf32>
    %25 = vector.broadcast %24 : vector<1x8x1xf32> to vector<1x8x128xf32>
    %26 = arith.mulf %11, %25 : vector<1x8x128xf32>
    %27 = vector.broadcast %3 : vector<1x1x128xf32> to vector<1x8x128xf32>
    %28 = arith.mulf %26, %27 : vector<1x8x128xf32>
    %29 = vector.broadcast %5 : vector<1x1x128xf32> to vector<1x8x128xf32>
    %30 = arith.addf %28, %29 : vector<1x8x128xf32>
    %cst_9 = arith.constant dense<0.000000e+00> : vector<1x128xf32>
    %31 = vector.multi_reduction <add>, %30, %cst_9 [1] : vector<1x8x128xf32> to vector<1x128xf32>
    %32 = vector.shape_cast %31 : vector<1x128xf32> to vector<1x1x128xf32>
    %cst_10 = arith.constant 8.000000e+00 : f32
    %33 = vector.broadcast %cst_10 : f32 to vector<1x1x128xf32>
    %34 = arith.divf %32, %33 : vector<1x1x128xf32>
    %35 = vector.broadcast %34 : vector<1x1x128xf32> to vector<1x8x128xf32>
    %36 = arith.subf %30, %35 : vector<1x8x128xf32>
    %c0_11 = arith.constant 0 : index
    %c0_12 = arith.constant 0 : index
    %c0_13 = arith.constant 0 : index
    %37 = vector.load %arg3[%c0_11, %c0_12, %c0_13] : memref<1x8x128xf32, #tpu.memory_space<vmem>>, vector<1x8x128xf32>
    tpu.vector_store %arg3[%c0_11, %c0_12, %c0_13], %36 {strides = array<i32>} : memref<1x8x128xf32, #tpu.memory_space<vmem>>, vector<1x8x128xf32>,
    return
  }
  func.func @transform_0(%arg0: i32) -> (i32, i32) {
    %c0_i32 = arith.constant 0 : i32
    %c0_i32_0 = arith.constant 0 : i32
    %c0_i32_1 = arith.constant 0 : i32
    return %c0_i32, %c0_i32_0 : i32, i32
  }
  func.func @transform_1(%arg0: i32) -> (i32, i32, i32) {
    %c0_i32 = arith.constant 0 : i32
    %c0_i32_0 = arith.constant 0 : i32
    %c0_i32_1 = arith.constant 0 : i32
    return %arg0, %c0_i32, %c0_i32_0 : i32, i32, i32
  }
  func.func @transform_2(%arg0: i32) -> (i32, i32, i32) {
    %c0_i32 = arith.constant 0 : i32
    %c0_i32_0 = arith.constant 0 : i32
    %c0_i32_1 = arith.constant 0 : i32
    return %arg0, %c0_i32, %c0_i32_0 : i32, i32, i32
  }
}

</mosaic_0001>

<llo_original>
// kernel: tpu_custom_call.1
$region0: #{tpu_custom_call.1}
  #allocation0 [shape = 'u32[]', space=smem, size = 0x4, offset = 0x4, fixed_abs, tag = 'smem constant byte address 0x4 - core index']
  #allocation1 [shape = 'u32[144,128]{1,0:T(1,128)}', space=vmem, size = 0x12000, scoped, tag = 'internal scratch']
  %s0 = inlined_call_operand.hbm [shape: f32[2,128], index: 0, kind: input, shape index: {}]
  %s1 = inlined_call_operand.hbm [shape: f32[2,8,128], index: 1, kind: input, shape index: {}]
  %s2 = inlined_call_operand.hbm [shape: f32[2,8,128], index: 2, kind: output, shape index: {}]
  %s3 = sld [smem:[#allocation0]]
  $region49: #{tpu_custom_call.1} parent=0
    _
  %s5 = ssub.s32 1, %s3
  %s6 = scalar_select 0, %s5, %s3
  $region1: #{tpu_custom_call.1} parent=0
    #allocation2 [shape = 'u8[1024]{0}', space=vmem, size = 0x400, scoped, tag = 'input window, operand 0, single buffered']
    #allocation3 [shape = 's32[2]{0}', space=sflag, size = 0x8, scoped, tag = 'scoped memory for tpu_custom_call.1']
    #allocation4 [shape = 's32[2]{0}', space=sflag, size = 0x8, scoped, tag = 'scoped memory for tpu_custom_call.1']
    #allocation5 [shape = 'u8[8192]{0}', space=vmem, size = 0x2000, scoped, tag = 'input window, operand 1']
    #allocation6 [shape = 's32[2]{0}', space=sflag, size = 0x8, scoped, tag = 'scoped memory for tpu_custom_call.1']
    #allocation7 [shape = 'u8[8192]{0}', space=vmem, size = 0x2000, scoped, tag = 'output window, operand 0']
    %7 = vsyncpa [#allocation3], 0
    %8 = vsyncpa [#allocation6], 0
    %s9 = scalar_lea.sflag [#allocation6], 1
    %10 = vsyncpa %s9, 0
    %11 = vsyncpa [#allocation4], 0
    %s12 = scalar_lea.sflag [#allocation4], 1
    %13 = vsyncpa %s12, 0
    loop: start=0, step=1, limit=4
    $region2: #{tpu_custom_call.1} parent=1 // loop_pre_header
      _
    $region3: #{tpu_custom_call.1} parent=1 // loop_header
      %s15 = sphi 0, %s19
      %p16 = scmp.ge.s32.totalorder %s15, 4
      %s23 = sphi 0, %s23
      %s25 = sphi 0, %s23
      %s26 = sphi 0, %s25
      %s40 = sphi 0, %s26
      %s46 = sphi 0, %s48
      %s49 = sphi 0, %s46
      %s50 = sphi 0, %s49
      %s66 = sphi 0, %s50
      %s72 = sphi 0, %s74
      %s75 = sphi 0, %s72
      %s76 = sphi 0, %s75
      %s92 = sphi 0, %s76
    $region4: #{tpu_custom_call.1} parent=1 // loop_header_branch
      %18 = sbr.rel (%p16) target = $region8
    $region5: #{tpu_custom_call.1} parent=1 // loop_body
      %s20 = ssub.s32 %s15, 1
      %s21 = ssub.s32 %s15, 2
      %s22 = sadd.s32 %s15, 1
      %s24 = sadd.s32 %s23, 1
      %p27 = scmp.eq.s32.totalorder %s15, 1
      %p28 = scmp.ne.s32.totalorder %s23, %s25
      %p29 = scmp.eq.s32.totalorder %s15, 0
      %p30 = por %p28, %p29
      %p31 = scmp.ne.s32.totalorder %s23, %s25
      %p32 = scmp.eq.s32.totalorder %s20, 1
      %p33 = por %p31, %p32
      %p34 = scmp.ne.s32.totalorder %s25, %s26
      %p35 = scmp.eq.s32.totalorder %s20, 0
      %p36 = por %p34, %p35
      %p37 = scmp.ne.s32.totalorder %s25, %s26
      %p38 = scmp.eq.s32.totalorder %s21, 1
      %p39 = por %p37, %p38
      %p41 = scmp.ne.s32.totalorder %s26, %s40
      %p42 = scmp.eq.s32.totalorder %s21, 0
      %p43 = por %p41, %p42
      %s44 = ssub.s32 %s15, %s22
      %p45 = scmp.eq.s32.totalorder %s44, 0
      %s47 = sadd.s32 %s46, 1
      %s48 = scalar_select %p45, %s46, %s47
      %p51 = pneg %p45
      %p52 = scmp.eq.s32.totalorder %s15, 1
      %p53 = por %p51, %p52
      %p54 = scmp.ne.s32.totalorder %s46, %s49
      %p55 = scmp.eq.s32.totalorder %s15, 0
      %p56 = por %p54, %p55
      %p57 = scmp.ne.s32.totalorder %s46, %s49
      %p58 = scmp.eq.s32.totalorder %s20, 1
      %p59 = por %p57, %p58
      %p60 = scmp.ne.s32.totalorder %s49, %s50
      %p61 = scmp.eq.s32.totalorder %s20, 0
      %p62 = por %p60, %p61
      %p63 = scmp.ne.s32.totalorder %s49, %s50
      %p64 = scmp.eq.s32.totalorder %s21, 1
      %p65 = por %p63, %p64
      %p67 = scmp.ne.s32.totalorder %s50, %s66
      %p68 = scmp.eq.s32.totalorder %s21, 0
      %p69 = por %p67, %p68
      %s70 = ssub.s32 %s15, %s22
      %p71 = scmp.eq.s32.totalorder %s70, 0
      %s73 = sadd.s32 %s72, 1
      %s74 = scalar_select %p71, %s72, %s73
      %p77 = pneg %p71
      %p78 = scmp.eq.s32.totalorder %s15, 1
      %p79 = por %p77, %p78
      %p80 = scmp.ne.s32.totalorder %s72, %s75
      %p81 = scmp.eq.s32.totalorder %s15, 0
      %p82 = por %p80, %p81
      %p83 = scmp.ne.s32.totalorder %s72, %s75
      %p84 = scmp.eq.s32.totalorder %s20, 1
      %p85 = por %p83, %p84
      %p86 = scmp.ne.s32.totalorder %s75, %s76
      %p87 = scmp.eq.s32.totalorder %s20, 0
      %p88 = por %p86, %p87
      %p89 = scmp.ne.s32.totalorder %s75, %s76
      %p90 = scmp.eq.s32.totalorder %s21, 1
      %p91 = por %p89, %p90
      %p93 = scmp.ne.s32.totalorder %s76, %s92
      %p94 = scmp.eq.s32.totalorder %s21, 0
      %p95 = por %p93, %p94
      %p96 = scmp.le.s32.totalorder 1, %s15
      %p97 = scmp.lt.s32.totalorder %s15, 3
      %p98 = pnand %p96, %p97
      %p99 = pneg %p98
      // Predicated region
      $region9: #{tpu_custom_call.1} parent=5 // pred_check
        _
      $region10: #{tpu_custom_call.1} parent=5 // pred_check_branch
        %101 = sbr.rel (%p98) target = $region12
      $region11: #{tpu_custom_call.1} parent=5 // pred_region
        %s102 = ssub.s32 %s15, 1
        // Predicated region
        $region13: #{tpu_custom_call.1} parent=11 // pred_check
          %p103 = pneg %p36
        $region14: #{tpu_custom_call.1} parent=11 // pred_check_branch
          %105 = sbr.rel (%p103) target = $region16
        $region15: #{tpu_custom_call.1} parent=11 // pred_region
          %s107 = ssub.s32 32, 32
          %108 = vsyncadd [#allocation3], %s107
          %s110 = sshll.u32 [#allocation2], 4
          %s111 = int_to_ptr.vmem [resolvable:$true] %s110
          %113 = dma.hbm_to_vmem [thread:$0]  %s0, 32, %s111, [#allocation3]
        $region16: #{tpu_custom_call.1} parent=11 // pred_fallthru
          _
      $region12: #{tpu_custom_call.1} parent=5 // pred_fallthru
        _
      %p114 = scmp.lt.s32.totalorder %s15, 2
      // Predicated region
      $region17: #{tpu_custom_call.1} parent=5 // pred_check
        %p115 = pneg %p114
      $region18: #{tpu_custom_call.1} parent=5 // pred_check_branch
        %117 = sbr.rel (%p115) target = $region20
      $region19: #{tpu_custom_call.1} parent=5 // pred_region
        // Predicated region
        $region21: #{tpu_custom_call.1} parent=19 // pred_check
          %p118 = pneg %p56
        $region22: #{tpu_custom_call.1} parent=19 // pred_check_branch
          %120 = sbr.rel (%p118) target = $region24
        $region23: #{tpu_custom_call.1} parent=19 // pred_region
          %s121 = sand.u32 %s46, 1
          %s122 = scalar_lea.sflag [#allocation6], %s121
          %s123 = sand.u32 %s46, 1
          %s124 = smul.addr %s123, 8
          %s125 = scalar_lea.vmem [#allocation5], %s124
          %s127 = ssub.s32 128, 128
          %128 = vsyncadd %s122, %s127
          %s129 = smul.addr %s15, 128
          %s130 = scalar_lea.hbm %s1, %s129
          %s132 = sshll.u32 %s125, 4
          %s133 = int_to_ptr.vmem [resolvable:$true] %s132
          %135 = dma.hbm_to_vmem [thread:$0]  %s130, 128, %s133, %s122
        $region24: #{tpu_custom_call.1} parent=19 // pred_fallthru
          _
      $region20: #{tpu_custom_call.1} parent=5 // pred_fallthru
        _
      %p136 = scmp.le.s32.totalorder 1, %s15
      %p137 = scmp.lt.s32.totalorder %s15, 3
      %p138 = pnand %p136, %p137
      %p139 = pneg %p138
      // Predicated region
      $region25: #{tpu_custom_call.1} parent=5 // pred_check
        _
      $region26: #{tpu_custom_call.1} parent=5 // pred_check_branch
        %141 = sbr.rel (%p138) target = $region28
      $region27: #{tpu_custom_call.1} parent=5 // pred_region
        %s142 = ssub.s32 %s15, 1
        // Predicated region
        $region29: #{tpu_custom_call.1} parent=27 // pred_check
          %p143 = pneg %p36
        $region30: #{tpu_custom_call.1} parent=27 // pred_check_branch
          %145 = sbr.rel (%p143) target = $region32
        $region31: #{tpu_custom_call.1} parent=27 // pred_region
          %146 = dma.done [#allocation3], 32
        $region32: #{tpu_custom_call.1} parent=27 // pred_fallthru
          _
        %s147 = sand.u32 %s49, 1
        %s148 = scalar_lea.sflag [#allocation6], %s147
        %s149 = sand.u32 %s49, 1
        %s150 = smul.addr %s149, 8
        %s151 = scalar_lea.vmem [#allocation5], %s150
        // Predicated region
        $region33: #{tpu_custom_call.1} parent=27 // pred_check
          %p152 = pneg %p62
        $region34: #{tpu_custom_call.1} parent=27 // pred_check_branch
          %154 = sbr.rel (%p152) target = $region36
        $region35: #{tpu_custom_call.1} parent=27 // pred_region
          %155 = dma.done %s148, 128
        $region36: #{tpu_custom_call.1} parent=27 // pred_fallthru
          _
        %p156 = pneg %p36
        %p157 = pneg %p33
        %s158 = sand.u32 %s49, 1
        %s159 = scalar_lea.sflag [#allocation6], %s158
        %s160 = sand.u32 %s49, 1
        %s161 = smul.addr %s160, 8
        %s162 = scalar_lea.vmem [#allocation5], %s161
        %p163 = pneg %p62
        %p164 = pneg %p59
        %p165 = pneg %p88
        %p166 = pneg %p85
        %s167 = sand.u32 %s75, 1
        %s168 = scalar_lea.sflag [#allocation4], %s167
        %s169 = sand.u32 %s75, 1
        %s170 = smul.addr %s169, 8
        %s171 = scalar_lea.vmem [#allocation7], %s170
        %v172 = vld [vmem:[%s151] sm:$0xff]
        %v173 = vld [vmem:[#allocation2] sm:$0x3]
        %174 = vadd.xlane.f32.xlu0 %v172
        %v175 = vpop.xlane.xlu0 %174
        %v176 = vmul.f32 %v175, 0.03125
        %v177 = vsub.f32 %v172, %v176
        %v178 = vlaneseq
        %v179 = vand.u32 %v178, 127
        %vm180 = vcmp.lt.s32.totalorder %v179, 32
        %v181 = vsel %vm180, %v177, 0.0
        %v182 = vmul.f32 %v181, %v181
        %183 = vadd.xlane.f32.xlu0 %v182
        %v184 = vpop.xlane.xlu0 %183
        %v185 = vmul.f32 %v184, 0.03125
        %v186 = vadd.f32 %v185, 1e-05
        %v187 = vrsqrt.pop %v186
        %v188 = vmul.f32 %v177, %v187
        %v189 = vlaneseq
        %v190 = vshrl.u32 %v189, 7
        %v191 = vsub.s32 0, %v190
        %v192 = vrot.slane %v173, %v191
        %v193 = vmul.f32 %v188, %v192
        %v194 = vlaneseq
        %v195 = vshrl.u32 %v194, 7
        %v196 = vsub.s32 1, %v195
        %v197 = vrot.slane %v173, %v196
        %v198 = vadd.f32 %v193, %v197
        %v199 = vrot.slane %v198, 4
        %v200 = vadd.f32 %v198, %v199
        %v201 = vrot.slane %v200, 2
        %v202 = vadd.f32 %v200, %v201
        %v203 = vrot.slane %v202, 1
        %v204 = vadd.f32 %v202, %v203
        %v205 = vrcp.pop 8.0
        %v206 = vmul.f32 %v204, %v205
        %v207 = vsub.f32 %v198, %v206
        %208 = vst [vmem:[%s171] sm:$0xff] %v207
        %s209 = sand.u32 %s75, 1
        %s210 = scalar_lea.sflag [#allocation4], %s209
        %s211 = sand.u32 %s75, 1
        %s212 = smul.addr %s211, 8
        %s213 = scalar_lea.vmem [#allocation7], %s212
        // Predicated region
        $region37: #{tpu_custom_call.1} parent=27 // pred_check
          %p214 = pneg %p85
        $region38: #{tpu_custom_call.1} parent=27 // pred_check_branch
          %216 = sbr.rel (%p214) target = $region40
        $region39: #{tpu_custom_call.1} parent=27 // pred_region
          %s218 = ssub.s32 128, 128
          %219 = vsyncadd %s210, %s218
          %s220 = smul.addr %s20, 128
          %s221 = scalar_lea.hbm %s2, %s220
          %s223 = sshll.u32 %s213, 4
          %s224 = int_to_ptr.vmem [resolvable:$true] %s223
          %226 = dma.vmem_to_hbm [thread:$0]  %s224, 128, %s221, %s210
        $region40: #{tpu_custom_call.1} parent=27 // pred_fallthru
          _
      $region28: #{tpu_custom_call.1} parent=5 // pred_fallthru
        _
      %p227 = scmp.le.s32.totalorder 2, %s15
      // Predicated region
      $region41: #{tpu_custom_call.1} parent=5 // pred_check
        %p228 = pneg %p227
      $region42: #{tpu_custom_call.1} parent=5 // pred_check_branch
        %230 = sbr.rel (%p228) target = $region44
      $region43: #{tpu_custom_call.1} parent=5 // pred_region
        %s231 = ssub.s32 %s15, 2
        // Predicated region
        $region45: #{tpu_custom_call.1} parent=43 // pred_check
          %p232 = pneg %p91
        $region46: #{tpu_custom_call.1} parent=43 // pred_check_branch
          %234 = sbr.rel (%p232) target = $region48
        $region47: #{tpu_custom_call.1} parent=43 // pred_region
          %s235 = sand.u32 %s76, 1
          %s236 = scalar_lea.sflag [#allocation4], %s235
          %s237 = sand.u32 %s76, 1
          %s238 = smul.addr %s237, 8
          %s239 = scalar_lea.vmem [#allocation7], %s238
          %240 = dma.done %s236, 128
        $region48: #{tpu_custom_call.1} parent=43 // pred_fallthru
          _
      $region44: #{tpu_custom_call.1} parent=5 // pred_fallthru
        _
    $region6: #{tpu_custom_call.1} parent=1 // loop_footer
      %s19 = sadd.s32 1, %s15
    $region7: #{tpu_custom_call.1} parent=1 // loop_footer_branch
      %14 = sbr.rel target = $region3
    $region8: #{tpu_custom_call.1} parent=1 // loop_exit
      _
    %241 = vsyncpa [#allocation3], 1
    %s242 = scalar_lea.sflag [#allocation3], 1
    %243 = vsyncpa %s242, 1
    %244 = vsyncpa [#allocation6], 1
    %s245 = scalar_lea.sflag [#allocation6], 1
    %246 = vsyncpa %s245, 1
    %247 = vsyncpa [#allocation4], 1
    %s248 = scalar_lea.sflag [#allocation4], 1
    %249 = vsyncpa %s248, 1

</llo_original>
